<compile_context>
chip_gen: v6e
topology: v6e:2x2x1
jax: 0.10.0
libtpu: 0.0.40
codegen_flags: <defaults>
</compile_context>

<pallas_src>
import functools

import numpy as np
import jax
import jax.numpy as jnp
from jax.experimental import pallas as pl
from jax.experimental.pallas import tpu as pltpu


def _round_up(x, m):
    return (x + m - 1) // m * m


def _text_cnn_kernel(x_ref, cw_ref, cb_ref, valid_ref, fw_ref, fb_ref, out_ref):
    # Fused im2col conv: all filter widths + all filter banks in one MXU matmul.
    acc = jax.lax.dot_general(
        x_ref[...], cw_ref[...],
        dimension_numbers=(((2,), (0,)), ((), ())),
        preferred_element_type=jnp.float32)              # [bB, L_pad, N_pad] f32

    _, L_pad, N_pad = acc.shape
    # Per-lane valid-length mask: filter size fs has S - fs + 1 valid positions.
    t_idx = jax.lax.broadcasted_iota(jnp.int32, (L_pad, N_pad), 0)
    mask = t_idx < valid_ref[...]                        # [L_pad, N_pad]
    acc = jnp.where(mask[None, :, :], acc, jnp.float32(-1e30))

    pooled = jnp.max(acc, axis=1)                        # max over time -> [bB, N_pad]
    # Bias + ReLU after the pool: max_t relu(a_t + b) == relu(max_t a_t + b).
    pooled = jnp.maximum(pooled + cb_ref[...], 0.0)

    # TODO(synk): dropout applied as identity (eval-mode semantics), no in-kernel RNG.
    out = jax.lax.dot_general(
        pooled.astype(jnp.bfloat16), fw_ref[...],
        dimension_numbers=(((1,), (0,)), ((), ())),
        preferred_element_type=jnp.float32)              # [bB, out_pad]
    out_ref[...] = out + fb_ref[...]


def cnn_forward_pallas(text, params, *, filter_sizes, n_filters, output_dim,
                       batch_block=8):
    """text: [S, B] int32 token ids (same axis convention as the PyTorch forward)."""
    filter_sizes = tuple(filter_sizes)
    nf = len(filter_sizes)
    F = n_filters
    fs_max, fs_min = max(filter_sizes), min(filter_sizes)

    tokens = text.T                                      # permute(1, 0) -> [B, S]
    B, S = tokens.shape
    assert S >= fs_max, "sequence shorter than the largest filter size"

    E = params["embedding"].shape[1]
    # TODO(synk): on bandwidth-poor chips (v5e) fold this gather into the kernel via
    # PrefetchScalarGridSpec row-gather instead of a wrapper-side jnp.take.
    emb = jnp.take(params["embedding"], tokens, axis=0)  # [B, S, E] f32

    # --- padded / merged shapes ------------------------------------------------
    bB = _round_up(min(batch_block, B), 8)               # batch tile (sublane-aligned)
    B_pad = _round_up(B, bB)
    L = S - fs_min + 1                                   # max #positions over filters
    L_pad = _round_up(L, 8)
    S_need = L_pad + fs_max - 1
    K = fs_max * E                                       # im2col contraction dim
    N = nf * F
    N_pad = _round_up(N, 128)                            # lane-dense merged conv width
    out_pad = _round_up(output_dim, 128)                 # lane-dense output width

    # --- im2col unfold (wrapper-side, avoids in-kernel sublane-shifted copies) --
    emb_p = jnp.pad(emb, ((0, B_pad - B), (0, S_need - S), (0, 0)))
    win = jnp.arange(L_pad)[:, None] + jnp.arange(fs_max)[None, :]   # [L_pad, fs_max]
    x = emb_p[:, win, :].reshape(B_pad, L_pad, K).astype(jnp.bfloat16)

    # --- merge conv weights / biases across filter sizes ------------------------
    cw = jnp.zeros((fs_max, E, N_pad), jnp.float32)
    cb = jnp.zeros((1, N_pad), jnp.float32)
    valid = np.zeros((1, N_pad), np.int32)
    for i, fs in enumerate(filter_sizes):
        cw = cw.at[:fs, :, i * F:(i + 1) * F].set(params[f"conv{i}_w"])
        cb = cb.at[:, i * F:(i + 1) * F].set(params[f"conv{i}_b"])
        valid[0, i * F:(i + 1) * F] = S - fs + 1
    cw = cw.reshape(K, N_pad).astype(jnp.bfloat16)
    valid = jnp.asarray(valid)

    fw = (jnp.zeros((N_pad, out_pad), jnp.float32)
          .at[:N, :output_dim].set(params["fc_w"]).astype(jnp.bfloat16))
    fb = jnp.zeros((1, out_pad), jnp.float32).at[:, :output_dim].set(params["fc_b"])

    # --- pallas call: grid over batch, bf16 inputs, f32 accumulation ------------
    grid = (B_pad // bB,)
    full2 = lambda shape: pl.BlockSpec(shape, lambda b: (0, 0))
    out = pl.pallas_call(
        _text_cnn_kernel,
        out_shape=jax.ShapeDtypeStruct((B_pad, out_pad), jnp.float32),
        grid=grid,
        in_specs=[
            pl.BlockSpec((bB, L_pad, K), lambda b: (b, 0, 0)),   # im2col activations
            full2((K, N_pad)),                                   # merged conv weight
            full2((1, N_pad)),                                   # merged conv bias
            full2((1, N_pad)),                                   # per-lane valid length
            full2((N_pad, out_pad)),                             # fc weight
            full2((1, out_pad)),                                 # fc bias
        ],
        out_specs=pl.BlockSpec((bB, out_pad), lambda b: (b, 0)),
        compiler_params=pltpu.CompilerParams(
            dimension_semantics=("parallel",),
            vmem_limit_bytes=32 * 1024 * 1024),
    )(x, cw, cb, valid, fw, fb)

    return out[:B, :output_dim]


def cnn_forward_reference(text, params, *, filter_sizes, n_filters, output_dim):
    """Pure-JAX f32 reference mirroring the PyTorch forward (eval mode)."""
    tokens = text.T
    emb = jnp.take(params["embedding"], tokens, axis=0)  # [B, S, E]
    B, S, E = emb.shape
    pooled = []
    for i, fs in enumerate(filter_sizes):
        w = params[f"conv{i}_w"]                         # [fs, E, F]
        b = params[f"conv{i}_b"]                         # [1, F]
        L = S - fs + 1
        conv = jnp.zeros((B, L, n_filters), jnp.float32)
        for k in range(fs):
            conv = conv + jnp.einsum("ble,ef->blf", emb[:, k:k + L, :], w[k])
        conv = jax.nn.relu(conv + b)
        pooled.append(jnp.max(conv, axis=1))
    cat = jnp.concatenate(pooled, axis=-1)
    return cat @ params["fc_w"] + params["fc_b"]


def init_params(key, *, vocab_size, embedding_dim, n_filters, filter_sizes,
                output_dim, pad_idx):
    n_keys = 1 + len(filter_sizes) * 2 + 2
    keys = list(jax.random.split(key, n_keys))
    params = {}

    emb = 0.1 * jax.random.normal(keys.pop(0), (vocab_size, embedding_dim), jnp.float32)
    emb = emb.at[pad_idx].set(0.0)                       # padding_idx row = 0
    params["embedding"] = emb

    for i, fs in enumerate(filter_sizes):
        fan_in = fs * embedding_dim
        scale = 1.0 / jnp.sqrt(jnp.float32(fan_in))
        params[f"conv{i}_w"] = scale * jax.random.normal(
            keys.pop(0), (fs, embedding_dim, n_filters), jnp.float32)
        params[f"conv{i}_b"] = scale * jax.random.normal(
            keys.pop(0), (1, n_filters), jnp.float32)

    fc_in = len(filter_sizes) * n_filters
    scale = 1.0 / jnp.sqrt(jnp.float32(fc_in))
    params["fc_w"] = scale * jax.random.normal(
        keys.pop(0), (fc_in, output_dim), jnp.float32)
    params["fc_b"] = scale * jax.random.normal(
        keys.pop(0), (1, output_dim), jnp.float32)
    return params


if __name__ == "__main__":
    # Small, forward-consistent sizes (batch chosen so the batch grid has 2 steps).
    vocab_size = 50
    output_dim = 5
    embedding_dim = 32
    n_filters = 8
    filter_sizes = (2, 3, 4)
    dropout = 0.5            # identity in eval mode
    pad_idx = 0
    seq_len = 8
    batch = 16

    root = jax.random.PRNGKey(0)
    k_params, k_text = jax.random.split(root)

    params = init_params(
        k_params,
        vocab_size=vocab_size, embedding_dim=embedding_dim,
        n_filters=n_filters, filter_sizes=filter_sizes,
        output_dim=output_dim, pad_idx=pad_idx)

    # text: [seq_len, batch] int32, as the PyTorch forward expects.
    text = jax.random.randint(k_text, (seq_len, batch), 0, vocab_size, dtype=jnp.int32)

    out = cnn_forward_pallas(
        text, params,
        filter_sizes=filter_sizes, n_filters=n_filters, output_dim=output_dim)
    out = jax.block_until_ready(out)

    ref = cnn_forward_reference(
        text, params,
        filter_sizes=filter_sizes, n_filters=n_filters, output_dim=output_dim)
    ref = jax.block_until_ready(ref)

    assert out.shape == (batch, output_dim), out.shape
    # bf16 MXU inputs vs f32 reference -> modest tolerance.
    assert jnp.allclose(out, ref, atol=2e-2, rtol=2e-2), (out, ref)
    print("KERNEL_OK")
</pallas_src>

<mosaic_0001>
module attributes {stable_mosaic.version = 11 : i64} {
  func.func @_text_cnn_kernel(%arg0: i32, %arg1: memref<8x8x128xbf16, #tpu.memory_space<vmem>>, %arg2: memref<128x128xbf16, #tpu.memory_space<vmem>>, %arg3: memref<1x128xf32, #tpu.memory_space<vmem>>, %arg4: memref<1x128xi32, #tpu.memory_space<vmem>>, %arg5: memref<128x128xbf16, #tpu.memory_space<vmem>>, %arg6: memref<1x128xf32, #tpu.memory_space<vmem>>, %arg7: memref<8x128xf32, #tpu.memory_space<vmem>>) attributes {dimension_semantics = [#tpu.dimension_semantics<parallel>], iteration_bounds = array<i64: 2>, scalar_prefetch = 0 : i64, scratch_operands = 0 : i64, tpu.core_type = #tpu.core_type<tc>, window_params = [{transform_indices = @transform_0, window_bounds = array<i64: 8, 8, 128>}, {pipeline_mode = #tpu.pipeline_mode<synchronous>, transform_indices = @transform_1, window_bounds = array<i64: 128, 128>}, {pipeline_mode = #tpu.pipeline_mode<synchronous>, transform_indices = @transform_2, window_bounds = array<i64: 1, 128>}, {pipeline_mode = #tpu.pipeline_mode<synchronous>, transform_indices = @transform_3, window_bounds = array<i64: 1, 128>}, {pipeline_mode = #tpu.pipeline_mode<synchronous>, transform_indices = @transform_4, window_bounds = array<i64: 128, 128>}, {pipeline_mode = #tpu.pipeline_mode<synchronous>, transform_indices = @transform_5, window_bounds = array<i64: 1, 128>}, {transform_indices = @transform_6, window_bounds = array<i64: 8, 128>}]} {
    %c0 = arith.constant 0 : index
    %c0_0 = arith.constant 0 : index
    %c0_1 = arith.constant 0 : index
    %0 = vector.load %arg1[%c0, %c0_0, %c0_1] : memref<8x8x128xbf16, #tpu.memory_space<vmem>>, vector<8x8x128xbf16>
    %c0_2 = arith.constant 0 : index
    %c0_3 = arith.constant 0 : index
    %1 = vector.load %arg2[%c0_2, %c0_3] : memref<128x128xbf16, #tpu.memory_space<vmem>>, vector<128x128xbf16>
    %cst = arith.constant dense<0.000000e+00> : vector<8x8x128xf32>
    %2 = tpu.matmul %0, %1, %cst {dimension_numbers = #tpu.dot_dimension_numbers<[2], [0], [0, 1], [1], [0, 0, 0, 1, 1, 1], [], []>} : vector<8x8x128xbf16>, vector<128x128xbf16>, vector<8x8x128xf32> -> vector<8x8x128xf32>
    %3 = tpu.iota {dimensions = array<i32: 0>} : vector<8x128xi32>
    %c0_4 = arith.constant 0 : index
    %c0_5 = arith.constant 0 : index
    %4 = vector.load %arg4[%c0_4, %c0_5] : memref<1x128xi32, #tpu.memory_space<vmem>>, vector<1x128xi32>
    %5 = vector.broadcast %4 : vector<1x128xi32> to vector<8x128xi32>
    %6 = arith.cmpi slt, %3, %5 : vector<8x128xi32>
    %7 = vector.shape_cast %6 : vector<8x128xi1> to vector<1x8x128xi1>
    %cst_6 = arith.constant -1.000000e+30 : f32
    %8 = vector.shape_cast %7 : vector<1x8x128xi1> to vector<1x8x128xi1>
    %9 = vector.broadcast %8 : vector<1x8x128xi1> to vector<8x8x128xi1>
    %10 = vector.broadcast %cst_6 : f32 to vector<8x8x128xf32>
    %11 = arith.select %9, %2, %10 : vector<8x8x128xi1>, vector<8x8x128xf32>
    %cst_7 = arith.constant dense<0xFF800000> : vector<8x128xf32>
    %12 = vector.multi_reduction <maximumf>, %11, %cst_7 [1] : vector<8x8x128xf32> to vector<8x128xf32>
    %c0_8 = arith.constant 0 : index
    %c0_9 = arith.constant 0 : index
    %13 = vector.load %arg3[%c0_8, %c0_9] : memref<1x128xf32, #tpu.memory_space<vmem>>, vector<1x128xf32>
    %14 = vector.broadcast %13 : vector<1x128xf32> to vector<8x128xf32>
    %15 = arith.addf %12, %14 : vector<8x128xf32>
    %cst_10 = arith.constant 0.000000e+00 : f32
    %16 = vector.broadcast %cst_10 : f32 to vector<8x128xf32>
    %17 = arith.maximumf %15, %16 : vector<8x128xf32>
    %18 = arith.truncf %17 : vector<8x128xf32> to vector<8x128xbf16>
    %c0_11 = arith.constant 0 : index
    %c0_12 = arith.constant 0 : index
    %19 = vector.load %arg5[%c0_11, %c0_12] : memref<128x128xbf16, #tpu.memory_space<vmem>>, vector<128x128xbf16>
    %cst_13 = arith.constant dense<0.000000e+00> : vector<8x128xf32>
    %20 = tpu.matmul %18, %19, %cst_13 {dimension_numbers = #tpu.dot_dimension_numbers<[1], [0], [0], [1], [0, 0, 1, 1], [], []>} : vector<8x128xbf16>, vector<128x128xbf16>, vector<8x128xf32> -> vector<8x128xf32>
    %c0_14 = arith.constant 0 : index
    %c0_15 = arith.constant 0 : index
    %21 = vector.load %arg6[%c0_14, %c0_15] : memref<1x128xf32, #tpu.memory_space<vmem>>, vector<1x128xf32>
    %22 = vector.broadcast %21 : vector<1x128xf32> to vector<8x128xf32>
    %23 = arith.addf %20, %22 : vector<8x128xf32>
    %c0_16 = arith.constant 0 : index
    %c0_17 = arith.constant 0 : index
    %24 = vector.load %arg7[%c0_16, %c0_17] : memref<8x128xf32, #tpu.memory_space<vmem>>, vector<8x128xf32>
    tpu.vector_store %arg7[%c0_16, %c0_17], %23 {strides = array<i32>} : memref<8x128xf32, #tpu.memory_space<vmem>>, vector<8x128xf32>,
    return
  }
  func.func @transform_0(%arg0: i32) -> (i32, i32, i32) {
    %c0_i32 = arith.constant 0 : i32
    %c0_i32_0 = arith.constant 0 : i32
    %c0_i32_1 = arith.constant 0 : i32
    return %arg0, %c0_i32, %c0_i32_0 : i32, i32, i32
  }
  func.func @transform_1(%arg0: i32) -> (i32, i32) {
    %c0_i32 = arith.constant 0 : i32
    %c0_i32_0 = arith.constant 0 : i32
    %c0_i32_1 = arith.constant 0 : i32
    return %c0_i32, %c0_i32_0 : i32, i32
  }
  func.func @transform_2(%arg0: i32) -> (i32, i32) {
    %c0_i32 = arith.constant 0 : i32
    %c0_i32_0 = arith.constant 0 : i32
    %c0_i32_1 = arith.constant 0 : i32
    return %c0_i32, %c0_i32_0 : i32, i32
  }
  func.func @transform_3(%arg0: i32) -> (i32, i32) {
    %c0_i32 = arith.constant 0 : i32
    %c0_i32_0 = arith.constant 0 : i32
    %c0_i32_1 = arith.constant 0 : i32
    return %c0_i32, %c0_i32_0 : i32, i32
  }
  func.func @transform_4(%arg0: i32) -> (i32, i32) {
    %c0_i32 = arith.constant 0 : i32
    %c0_i32_0 = arith.constant 0 : i32
    %c0_i32_1 = arith.constant 0 : i32
    return %c0_i32, %c0_i32_0 : i32, i32
  }
  func.func @transform_5(%arg0: i32) -> (i32, i32) {
    %c0_i32 = arith.constant 0 : i32
    %c0_i32_0 = arith.constant 0 : i32
    %c0_i32_1 = arith.constant 0 : i32
    return %c0_i32, %c0_i32_0 : i32, i32
  }
  func.func @transform_6(%arg0: i32) -> (i32, i32) {
    %c0_i32 = arith.constant 0 : i32
    %c0_i32_0 = arith.constant 0 : i32
    return %arg0, %c0_i32 : i32, i32
  }
}

</mosaic_0001>

<llo_original>
// kernel: tpu_custom_call.1
$region0: #{tpu_custom_call.1}
  #allocation0 [shape = 'u32[]', space=smem, size = 0x4, offset = 0x4, fixed_abs, tag = 'smem constant byte address 0x4 - core index']
  #allocation1 [shape = 'u32[144,128]{1,0:T(1,128)}', space=vmem, size = 0x12000, scoped, tag = 'internal scratch']
  %s0 = inlined_call_operand.hbm [shape: bf16[16,8,128], index: 0, kind: input, shape index: {}]
  %s1 = inlined_call_operand.hbm [shape: bf16[128,128], index: 1, kind: input, shape index: {}]
  %s2 = inlined_call_operand.vmem [shape: f32[1,128], index: 2, kind: input, shape index: {}]
  %s3 = inlined_call_operand.vmem [shape: s32[1,128], index: 3, kind: input, shape index: {}]
  %s4 = inlined_call_operand.hbm [shape: bf16[128,128], index: 4, kind: input, shape index: {}]
  %s5 = inlined_call_operand.vmem [shape: f32[1,128], index: 5, kind: input, shape index: {}]
  %s6 = inlined_call_operand.hbm [shape: f32[16,128], index: 6, kind: output, shape index: {}]
  %s7 = sld [smem:[#allocation0]]
  $region69: #{tpu_custom_call.1} parent=0
    _
  %s9 = ssub.s32 1, %s7
  %s10 = scalar_select 0, %s9, %s7
  $region1: #{tpu_custom_call.1} parent=0
    #allocation2 [shape = 'u8[32768]{0}', space=vmem, size = 0x8000, scoped, tag = 'input window, operand 0']
    #allocation3 [shape = 's32[2]{0}', space=sflag, size = 0x8, scoped, tag = 'scoped memory for tpu_custom_call.1']
    #allocation4 [shape = 's32[2]{0}', space=sflag, size = 0x8, scoped, tag = 'scoped memory for tpu_custom_call.1']
    #allocation5 [shape = 'u8[32768]{0}', space=vmem, size = 0x8000, scoped, tag = 'input window, operand 1, single buffered']
    #allocation6 [shape = 's32[1]{0}', space=sflag, size = 0x4, scoped, tag = 'scoped memory for tpu_custom_call.1']
    #allocation7 [shape = 'u8[32768]{0}', space=vmem, size = 0x8000, scoped, tag = 'input window, operand 4, single buffered']
    #allocation8 [shape = 'u8[8192]{0}', space=vmem, size = 0x2000, scoped, tag = 'output window, operand 0']
    %11 = vsyncpa [#allocation3], 0
    %s12 = scalar_lea.sflag [#allocation3], 1
    %13 = vsyncpa %s12, 0
    %14 = vsyncpa [#allocation6], 0
    %15 = vsyncpa [#allocation4], 0
    %s16 = scalar_lea.sflag [#allocation4], 1
    %17 = vsyncpa %s16, 0
    loop: start=0, step=1, limit=4
    $region2: #{tpu_custom_call.1} parent=1 // loop_pre_header
      _
    $region3: #{tpu_custom_call.1} parent=1 // loop_header
      %s19 = sphi 0, %s23
      %p20 = scmp.ge.s32.totalorder %s19, 4
      %s29 = sphi 0, %s31
      %s32 = sphi 0, %s29
      %s33 = sphi 0, %s32
      %s49 = sphi 0, %s33
      %s53 = sphi 0, %s53
      %s55 = sphi 0, %s53
      %s56 = sphi 0, %s55
      %s70 = sphi 0, %s56
      %s74 = sphi 0, %s74
      %s76 = sphi 0, %s74
      %s77 = sphi 0, %s76
      %s91 = sphi 0, %s77
      %s95 = sphi 0, %s95
      %s97 = sphi 0, %s95
      %s98 = sphi 0, %s97
      %s112 = sphi 0, %s98
      %s116 = sphi 0, %s116
      %s118 = sphi 0, %s116
      %s119 = sphi 0, %s118
      %s133 = sphi 0, %s119
      %s137 = sphi 0, %s137
      %s139 = sphi 0, %s137
      %s140 = sphi 0, %s139
      %s154 = sphi 0, %s140
      %s160 = sphi 0, %s162
      %s163 = sphi 0, %s160
      %s164 = sphi 0, %s163
      %s180 = sphi 0, %s164
    $region4: #{tpu_custom_call.1} parent=1 // loop_header_branch
      %22 = sbr.rel (%p20) target = $region8
    $region5: #{tpu_custom_call.1} parent=1 // loop_body
      %s24 = ssub.s32 %s19, 1
      %s25 = ssub.s32 %s19, 2
      %s26 = sadd.s32 %s19, 1
      %s27 = ssub.s32 %s19, %s26
      %p28 = scmp.eq.s32.totalorder %s27, 0
      %s30 = sadd.s32 %s29, 1
      %s31 = scalar_select %p28, %s29, %s30
      %p34 = pneg %p28
      %p35 = scmp.eq.s32.totalorder %s19, 1
      %p36 = por %p34, %p35
      %p37 = scmp.ne.s32.totalorder %s29, %s32
      %p38 = scmp.eq.s32.totalorder %s19, 0
      %p39 = por %p37, %p38
      %p40 = scmp.ne.s32.totalorder %s29, %s32
      %p41 = scmp.eq.s32.totalorder %s24, 1
      %p42 = por %p40, %p41
      %p43 = scmp.ne.s32.totalorder %s32, %s33
      %p44 = scmp.eq.s32.totalorder %s24, 0
      %p45 = por %p43, %p44
      %p46 = scmp.ne.s32.totalorder %s32, %s33
      %p47 = scmp.eq.s32.totalorder %s25, 1
      %p48 = por %p46, %p47
      %p50 = scmp.ne.s32.totalorder %s33, %s49
      %p51 = scmp.eq.s32.totalorder %s25, 0
      %p52 = por %p50, %p51
      %s54 = sadd.s32 %s53, 1
      %p57 = scmp.eq.s32.totalorder %s19, 1
      %p58 = scmp.ne.s32.totalorder %s53, %s55
      %p59 = scmp.eq.s32.totalorder %s19, 0
      %p60 = por %p58, %p59
      %p61 = scmp.ne.s32.totalorder %s53, %s55
      %p62 = scmp.eq.s32.totalorder %s24, 1
      %p63 = por %p61, %p62
      %p64 = scmp.ne.s32.totalorder %s55, %s56
      %p65 = scmp.eq.s32.totalorder %s24, 0
      %p66 = por %p64, %p65
      %p67 = scmp.ne.s32.totalorder %s55, %s56
      %p68 = scmp.eq.s32.totalorder %s25, 1
      %p69 = por %p67, %p68
      %p71 = scmp.ne.s32.totalorder %s56, %s70
      %p72 = scmp.eq.s32.totalorder %s25, 0
      %p73 = por %p71, %p72
      %s75 = sadd.s32 %s74, 1
      %p78 = scmp.eq.s32.totalorder %s19, 1
      %p79 = scmp.ne.s32.totalorder %s74, %s76
      %p80 = scmp.eq.s32.totalorder %s19, 0
      %p81 = por %p79, %p80
      %p82 = scmp.ne.s32.totalorder %s74, %s76
      %p83 = scmp.eq.s32.totalorder %s24, 1
      %p84 = por %p82, %p83
      %p85 = scmp.ne.s32.totalorder %s76, %s77
      %p86 = scmp.eq.s32.totalorder %s24, 0
      %p87 = por %p85, %p86
      %p88 = scmp.ne.s32.totalorder %s76, %s77
      %p89 = scmp.eq.s32.totalorder %s25, 1
      %p90 = por %p88, %p89
      %p92 = scmp.ne.s32.totalorder %s77, %s91
      %p93 = scmp.eq.s32.totalorder %s25, 0
      %p94 = por %p92, %p93
      %s96 = sadd.s32 %s95, 1
      %p99 = scmp.eq.s32.totalorder %s19, 1
      %p100 = scmp.ne.s32.totalorder %s95, %s97
      %p101 = scmp.eq.s32.totalorder %s19, 0
      %p102 = por %p100, %p101
      %p103 = scmp.ne.s32.totalorder %s95, %s97
      %p104 = scmp.eq.s32.totalorder %s24, 1
      %p105 = por %p103, %p104
      %p106 = scmp.ne.s32.totalorder %s97, %s98
      %p107 = scmp.eq.s32.totalorder %s24, 0
      %p108 = por %p106, %p107
      %p109 = scmp.ne.s32.totalorder %s97, %s98
      %p110 = scmp.eq.s32.totalorder %s25, 1
      %p111 = por %p109, %p110
      %p113 = scmp.ne.s32.totalorder %s98, %s112
      %p114 = scmp.eq.s32.totalorder %s25, 0
      %p115 = por %p113, %p114
      %s117 = sadd.s32 %s116, 1
      %p120 = scmp.eq.s32.totalorder %s19, 1
      %p121 = scmp.ne.s32.totalorder %s116, %s118
      %p122 = scmp.eq.s32.totalorder %s19, 0
      %p123 = por %p121, %p122
      %p124 = scmp.ne.s32.totalorder %s116, %s118
      %p125 = scmp.eq.s32.totalorder %s24, 1
      %p126 = por %p124, %p125
      %p127 = scmp.ne.s32.totalorder %s118, %s119
      %p128 = scmp.eq.s32.totalorder %s24, 0
      %p129 = por %p127, %p128
      %p130 = scmp.ne.s32.totalorder %s118, %s119
      %p131 = scmp.eq.s32.totalorder %s25, 1
      %p132 = por %p130, %p131
      %p134 = scmp.ne.s32.totalorder %s119, %s133
      %p135 = scmp.eq.s32.totalorder %s25, 0
      %p136 = por %p134, %p135
      %s138 = sadd.s32 %s137, 1
      %p141 = scmp.eq.s32.totalorder %s19, 1
      %p142 = scmp.ne.s32.totalorder %s137, %s139
      %p143 = scmp.eq.s32.totalorder %s19, 0
      %p144 = por %p142, %p143
      %p145 = scmp.ne.s32.totalorder %s137, %s139
      %p146 = scmp.eq.s32.totalorder %s24, 1
      %p147 = por %p145, %p146
      %p148 = scmp.ne.s32.totalorder %s139, %s140
      %p149 = scmp.eq.s32.totalorder %s24, 0
      %p150 = por %p148, %p149
      %p151 = scmp.ne.s32.totalorder %s139, %s140
      %p152 = scmp.eq.s32.totalorder %s25, 1
      %p153 = por %p151, %p152
      %p155 = scmp.ne.s32.totalorder %s140, %s154
      %p156 = scmp.eq.s32.totalorder %s25, 0
      %p157 = por %p155, %p156
      %s158 = ssub.s32 %s19, %s26
      %p159 = scmp.eq.s32.totalorder %s158, 0
      %s161 = sadd.s32 %s160, 1
      %s162 = scalar_select %p159, %s160, %s161
      %p165 = pneg %p159
      %p166 = scmp.eq.s32.totalorder %s19, 1
      %p167 = por %p165, %p166
      %p168 = scmp.ne.s32.totalorder %s160, %s163
      %p169 = scmp.eq.s32.totalorder %s19, 0
      %p170 = por %p168, %p169
      %p171 = scmp.ne.s32.totalorder %s160, %s163
      %p172 = scmp.eq.s32.totalorder %s24, 1
      %p173 = por %p171, %p172
      %p174 = scmp.ne.s32.totalorder %s163, %s164
      %p175 = scmp.eq.s32.totalorder %s24, 0
      %p176 = por %p174, %p175
      %p177 = scmp.ne.s32.totalorder %s163, %s164
      %p178 = scmp.eq.s32.totalorder %s25, 1
      %p179 = por %p177, %p178
      %p181 = scmp.ne.s32.totalorder %s164, %s180
      %p182 = scmp.eq.s32.totalorder %s25, 0
      %p183 = por %p181, %p182
      %p184 = scmp.le.s32.totalorder 1, %s19
      %p185 = scmp.lt.s32.totalorder %s19, 3
      %p186 = pnand %p184, %p185
      %p187 = pneg %p186
      // Predicated region
      $region9: #{tpu_custom_call.1} parent=5 // pred_check
        _
      $region10: #{tpu_custom_call.1} parent=5 // pred_check_branch
        %189 = sbr.rel (%p186) target = $region12
      $region11: #{tpu_custom_call.1} parent=5 // pred_region
        %s190 = ssub.s32 %s19, 1
        // Predicated region
        $region13: #{tpu_custom_call.1} parent=11 // pred_check
          %p191 = pneg %p66
        $region14: #{tpu_custom_call.1} parent=11 // pred_check_branch
          %193 = sbr.rel (%p191) target = $region16
        $region15: #{tpu_custom_call.1} parent=11 // pred_region
          %s195 = ssub.s32 1024, 1024
          %196 = vsyncadd [#allocation6], %s195
          %s197 = sshll.u32 [#allocation5], 4
          %s198 = int_to_ptr.vmem [resolvable:$true] %s197
          %203 = dma.hbm_to_vmem [thread:$0]  %s1, 1024, %s198, [#allocation6], 64, 64, 4
        $region16: #{tpu_custom_call.1} parent=11 // pred_fallthru
          _
        // Predicated region
        $region17: #{tpu_custom_call.1} parent=11 // pred_check
          %p204 = pneg %p87
        $region18: #{tpu_custom_call.1} parent=11 // pred_check_branch
          %206 = sbr.rel (%p204) target = $region20
        $region19: #{tpu_custom_call.1} parent=11 // pred_region
          _
        $region20: #{tpu_custom_call.1} parent=11 // pred_fallthru
          _
        // Predicated region
        $region21: #{tpu_custom_call.1} parent=11 // pred_check
          %p207 = pneg %p108
        $region22: #{tpu_custom_call.1} parent=11 // pred_check_branch
          %209 = sbr.rel (%p207) target = $region24
        $region23: #{tpu_custom_call.1} parent=11 // pred_region
          _
        $region24: #{tpu_custom_call.1} parent=11 // pred_fallthru
          _
        // Predicated region
        $region25: #{tpu_custom_call.1} parent=11 // pred_check
          %p210 = pneg %p129
        $region26: #{tpu_custom_call.1} parent=11 // pred_check_branch
          %212 = sbr.rel (%p210) target = $region28
        $region27: #{tpu_custom_call.1} parent=11 // pred_region
          %s214 = ssub.s32 1024, 1024
          %215 = vsyncadd [#allocation6], %s214
          %s216 = sshll.u32 [#allocation7], 4
          %s217 = int_to_ptr.vmem [resolvable:$true] %s216
          %222 = dma.hbm_to_vmem [thread:$0]  %s4, 1024, %s217, [#allocation6], 64, 64, 4
        $region28: #{tpu_custom_call.1} parent=11 // pred_fallthru
          _
        // Predicated region
        $region29: #{tpu_custom_call.1} parent=11 // pred_check
          %p223 = pneg %p150
        $region30: #{tpu_custom_call.1} parent=11 // pred_check_branch
          %225 = sbr.rel (%p223) target = $region32
        $region31: #{tpu_custom_call.1} parent=11 // pred_region
          _
        $region32: #{tpu_custom_call.1} parent=11 // pred_fallthru
          _
      $region12: #{tpu_custom_call.1} parent=5 // pred_fallthru
        _
      %p226 = scmp.lt.s32.totalorder %s19, 2
      // Predicated region
      $region33: #{tpu_custom_call.1} parent=5 // pred_check
        %p227 = pneg %p226
      $region34: #{tpu_custom_call.1} parent=5 // pred_check_branch
        %229 = sbr.rel (%p227) target = $region36
      $region35: #{tpu_custom_call.1} parent=5 // pred_region
        // Predicated region
        $region37: #{tpu_custom_call.1} parent=35 // pred_check
          %p230 = pneg %p39
        $region38: #{tpu_custom_call.1} parent=35 // pred_check_branch
          %232 = sbr.rel (%p230) target = $region40
        $region39: #{tpu_custom_call.1} parent=35 // pred_region
          %s233 = sand.u32 %s29, 1
          %s234 = scalar_lea.sflag [#allocation3], %s233
          %s235 = sand.u32 %s29, 1
          %s236 = smul.addr %s235, 32
          %s237 = scalar_lea.vmem [#allocation2], %s236
          %s238 = smul.u32 8, %s19
          %s240 = ssub.s32 512, 512
          %241 = vsyncadd %s234, %s240
          %s242 = smul.addr %s238, 64
          %s243 = scalar_lea.hbm %s0, %s242
          %s244 = sshll.u32 %s237, 4
          %s245 = int_to_ptr.vmem [resolvable:$true] %s244
          %250 = dma.hbm_to_vmem [thread:$0]  %s243, 512, %s245, %s234, 64, 64, 4
        $region40: #{tpu_custom_call.1} parent=35 // pred_fallthru
          _
      $region36: #{tpu_custom_call.1} parent=5 // pred_fallthru
        _
      %p251 = scmp.le.s32.totalorder 1, %s19
      %p252 = scmp.lt.s32.totalorder %s19, 3
      %p253 = pnand %p251, %p252
      %p254 = pneg %p253
      // Predicated region
      $region41: #{tpu_custom_call.1} parent=5 // pred_check
        _
      $region42: #{tpu_custom_call.1} parent=5 // pred_check_branch
        %256 = sbr.rel (%p253) target = $region44
      $region43: #{tpu_custom_call.1} parent=5 // pred_region
        %s257 = ssub.s32 %s19, 1
        %s258 = sand.u32 %s32, 1
        %s259 = scalar_lea.sflag [#allocation3], %s258
        %s260 = sand.u32 %s32, 1
        %s261 = smul.addr %s260, 32
        %s262 = scalar_lea.vmem [#allocation2], %s261
        // Predicated region
        $region45: #{tpu_custom_call.1} parent=43 // pred_check
          %p263 = pneg %p45
        $region46: #{tpu_custom_call.1} parent=43 // pred_check_branch
          %265 = sbr.rel (%p263) target = $region48
        $region47: #{tpu_custom_call.1} parent=43 // pred_region
          %266 = dma.done %s259, 512
        $region48: #{tpu_custom_call.1} parent=43 // pred_fallthru
          _
        // Predicated region
        $region49: #{tpu_custom_call.1} parent=43 // pred_check
          %p267 = pneg %p66
        $region50: #{tpu_custom_call.1} parent=43 // pred_check_branch
          %269 = sbr.rel (%p267) target = $region52
        $region51: #{tpu_custom_call.1} parent=43 // pred_region
          %270 = dma.done [#allocation6], 1024
        $region52: #{tpu_custom_call.1} parent=43 // pred_fallthru
          _
        // Predicated region
        $region53: #{tpu_custom_call.1} parent=43 // pred_check
          %p271 = pneg %p129
        $region54: #{tpu_custom_call.1} parent=43 // pred_check_branch
          %273 = sbr.rel (%p271) target = $region56
        $region55: #{tpu_custom_call.1} parent=43 // pred_region
          %274 = dma.done [#allocation6], 1024
        $region56: #{tpu_custom_call.1} parent=43 // pred_fallthru
          _
        %s275 = sand.u32 %s32, 1
        %s276 = scalar_lea.sflag [#allocation3], %s275
        %s277 = sand.u32 %s32, 1
        %s278 = smul.addr %s277, 32
        %s279 = scalar_lea.vmem [#allocation2], %s278
        %p280 = pneg %p45
        %p281 = pneg %p42
        %p282 = pneg %p66
        %p283 = pneg %p63
        %p284 = pneg %p87
        %p285 = pneg %p84
        %p286 = pneg %p108
        %p287 = pneg %p105
        %p288 = pneg %p129
        %p289 = pneg %p126
        %p290 = pneg %p150
        %p291 = pneg %p147
        %p292 = pneg %p176
        %p293 = pneg %p173
        %s294 = sand.u32 %s163, 1
        %s295 = scalar_lea.sflag [#allocation4], %s294
        %s296 = sand.u32 %s163, 1
        %s297 = smul.addr %s296, 8
        %s298 = scalar_lea.vmem [#allocation8], %s297
        %s299 = smul.u32 8, %s24
        %v301 = vld [vmem:[%s262] sm:$0xf]
        %v302 = vld [vmem:[%s262 + $0x4] sm:$0xf]
        %v303 = vld [vmem:[%s262 + $0x8] sm:$0xf]
        %v304 = vld [vmem:[%s262 + $0xc] sm:$0xf]
        %v305 = vld [vmem:[%s262 + $0x10] sm:$0xf]
        %v306 = vld [vmem:[%s262 + $0x14] sm:$0xf]
        %v307 = vld [vmem:[%s262 + $0x18] sm:$0xf]
        %v308 = vld [vmem:[%s262 + $0x1c] sm:$0xf]
        %v309 = vld [vmem:[#allocation5] sm:$0xf]
        %v310 = vld [vmem:[#allocation5 + $0x4] sm:$0xf]
        %v311 = vld [vmem:[#allocation5 + $0x8] sm:$0xf]
        %v312 = vld [vmem:[#allocation5 + $0xc] sm:$0xf]
        %v313 = vld [vmem:[#allocation5 + $0x10] sm:$0xf]
        %v314 = vld [vmem:[#allocation5 + $0x14] sm:$0xf]
        %v315 = vld [vmem:[#allocation5 + $0x18] sm:$0xf]
        %v316 = vld [vmem:[#allocation5 + $0x1c] sm:$0xf]
        %v317 = vld [vmem:[#allocation5 + $0x20] sm:$0xf]
        %v318 = vld [vmem:[#allocation5 + $0x24] sm:$0xf]
        %v319 = vld [vmem:[#allocation5 + $0x28] sm:$0xf]
        %v320 = vld [vmem:[#allocation5 + $0x2c] sm:$0xf]
        %v321 = vld [vmem:[#allocation5 + $0x30] sm:$0xf]
        %v322 = vld [vmem:[#allocation5 + $0x34] sm:$0xf]
        %v323 = vld [vmem:[#allocation5 + $0x38] sm:$0xf]
        %v324 = vld [vmem:[#allocation5 + $0x3c] sm:$0xf]
        %v333 = vunpack.c.l.b16 %v301
        %v334 = vunpack.c.l.b16 %v302
        %v335 = vunpack.c.l.b16 %v303
        %v336 = vunpack.c.l.b16 %v304
        %v337 = vunpack.c.l.b16 %v305
        %v338 = vunpack.c.l.b16 %v306
        %v339 = vunpack.c.l.b16 %v307
        %v340 = vunpack.c.l.b16 %v308
        %v341 = vpack.c.b16 %v334, %v333
        %v342 = vpack.c.b16 %v336, %v335
        %v343 = vpack.c.b16 %v338, %v337
        %v344 = vpack.c.b16 %v340, %v339
        %v365 = vunpack.c.l.b16 %v309
        %v366 = vunpack.c.l.b16 %v310
        %v367 = vunpack.c.l.b16 %v311
        %v368 = vunpack.c.l.b16 %v312
        %v369 = vunpack.c.l.b16 %v313
        %v370 = vunpack.c.l.b16 %v314
        %v371 = vunpack.c.l.b16 %v315
        %v372 = vunpack.c.l.b16 %v316
        %v373 = vunpack.c.l.b16 %v317
        %v374 = vunpack.c.l.b16 %v318
        %v375 = vunpack.c.l.b16 %v319
        %v376 = vunpack.c.l.b16 %v320
        %v377 = vunpack.c.l.b16 %v321
        %v378 = vunpack.c.l.b16 %v322
        %v379 = vunpack.c.l.b16 %v323
        %v380 = vunpack.c.l.b16 %v324
        %v381 = vpack.c.b16 %v366, %v365
        %v382 = vpack.c.b16 %v368, %v367
        %v383 = vpack.c.b16 %v370, %v369
        %v384 = vpack.c.b16 %v372, %v371
        %v385 = vpack.c.b16 %v374, %v373
        %v386 = vpack.c.b16 %v376, %v375
        %v387 = vpack.c.b16 %v378, %v377
        %v388 = vpack.c.b16 %v380, %v379
        %397 = vmatprep.subr.bf16.mxu0 0
        %398 = vmatpush1.bf16.msra.mxu0 %v388
        %399 = vmatprep.subr.bf16.mxu0 0
        %400 = vmatpush1.bf16.msra.mxu0 %v387
        %401 = vmatprep.subr.bf16.mxu0 0
        %402 = vmatpush1.bf16.msra.mxu0 %v386
        %403 = vmatprep.subr.bf16.mxu0 0
        %404 = vmatpush1.bf16.msra.mxu0 %v385
        %405 = vmatprep.subr.bf16.mxu0 0
        %406 = vmatpush1.bf16.msra.mxu0 %v384
        %407 = vmatprep.subr.bf16.mxu0 0
        %408 = vmatpush1.bf16.msra.mxu0 %v383
        %409 = vmatprep.subr.bf16.mxu0 0
        %410 = vmatpush1.bf16.msra.mxu0 %v382
        %411 = vmatprep.subr.bf16.mxu0 0
        %412 = vmatpush1.bf16.msra.mxu0 %v381
        %413 = vmatprep.subr.bf16.mxu0 0
        %414 = vmatpush2.bf16.msra.mxu0 0
        %415 = vmatprep.subr.bf16.mxu0 0
        %416 = vmatpush2.bf16.msra.mxu0 0
        %417 = vmatprep.subr.bf16.mxu0 0
        %418 = vmatpush2.bf16.msra.mxu0 0
        %419 = vmatprep.subr.bf16.mxu0 0
        %420 = vmatpush2.bf16.msra.mxu0 0
        %421 = vmatprep.subr.bf16.mxu0 0
        %422 = vmatpush2.bf16.msra.mxu0 0
        %423 = vmatprep.subr.bf16.mxu0 0
        %424 = vmatpush2.bf16.msra.mxu0 0
        %425 = vmatprep.subr.bf16.mxu0 0
        %426 = vmatpush2.bf16.msra.mxu0 0
        %427 = vmatprep.subr.bf16.mxu0 0
        %428 = vmatpush2.bf16.msra.mxu0 0
        %429 = vmatprep.mubr.bf16.mxu0 0
        %430 = vmatmul.mubr.bf16.gmra.mxu0 %v341
        %v431 = vpop.f32.mrf.mxu0
        %v432 = vadd.f32 0.0, %v431
        %v433 = vpop.f32.mrf.mxu0
        %v434 = vpop.f32.mrf.mxu0
        %v435 = vadd.f32 0.0, %v434
        %v436 = vpop.f32.mrf.mxu0
        %437 = vmatprep.mubr.bf16.mxu0 0
        %438 = vmatmul.mubr.bf16.gmra.mxu0 %v342
        %v439 = vpop.f32.mrf.mxu0
        %v440 = vadd.f32 0.0, %v439
        %v441 = vpop.f32.mrf.mxu0
        %v442 = vpop.f32.mrf.mxu0
        %v443 = vadd.f32 0.0, %v442
        %v444 = vpop.f32.mrf.mxu0
        %445 = vmatprep.mubr.bf16.mxu0 0
        %446 = vmatmul.mubr.bf16.gmra.mxu0 %v343
        %v447 = vpop.f32.mrf.mxu0
        %v448 = vadd.f32 0.0, %v447
        %v449 = vpop.f32.mrf.mxu0
        %v450 = vpop.f32.mrf.mxu0
        %v451 = vadd.f32 0.0, %v450
        %v452 = vpop.f32.mrf.mxu0
        %453 = vmatprep.mubr.bf16.mxu0 0
        %454 = vmatmul.mubr.bf16.gmra.mxu0 %v344
        %v455 = vpop.f32.mrf.mxu0
        %v456 = vadd.f32 0.0, %v455
        %v457 = vpop.f32.mrf.mxu0
        %v458 = vpop.f32.mrf.mxu0
        %v459 = vadd.f32 0.0, %v458
        %v460 = vpop.f32.mrf.mxu0
        %461 = vdwg.mxu0
        %v462 = vlaneseq
        %v463 = vshrl.u32 %v462, 7
        %v464 = vld [vmem:[%s3] sm:$0x1]
        %v465 = vlaneseq
        %v466 = vshrl.u32 %v465, 7
        %v467 = vsub.s32 0, %v466
        %v468 = vrot.slane %v464, %v467
        %vm469 = vcmp.lt.s32.totalorder %v463, %v468
        %v470 = vsel %vm469, 1, 0
        %vm471 = vcmp.eq.s32.totalorder %v470, 1
        %v472 = vsel %vm471, %v432, -1e+30
        %v473 = vsel %vm471, %v435, -1e+30
        %v474 = vsel %vm471, %v440, -1e+30
        %v475 = vsel %vm471, %v443, -1e+30
        %v476 = vsel %vm471, %v448, -1e+30
        %v477 = vsel %vm471, %v451, -1e+30
        %v478 = vsel %vm471, %v456, -1e+30
        %v479 = vsel %vm471, %v459, -1e+30
        %v480 = vrot.slane %v472, 4
        %v481 = vmax.f32 %v472, %v480
        %v482 = vrot.slane %v481, 2
        %v483 = vmax.f32 %v481, %v482
        %v484 = vrot.slane %v483, 1
        %v485 = vmax.f32 %v483, %v484
        %v486 = vrot.slane %v473, 4
        %v487 = vmax.f32 %v473, %v486
        %v488 = vrot.slane %v487, 2
        %v489 = vmax.f32 %v487, %v488
        %v490 = vrot.slane %v489, 1
        %v491 = vmax.f32 %v489, %v490
        %v492 = vrot.slane %v474, 4
        %v493 = vmax.f32 %v474, %v492
        %v494 = vrot.slane %v493, 2
        %v495 = vmax.f32 %v493, %v494
        %v496 = vrot.slane %v495, 1
        %v497 = vmax.f32 %v495, %v496
        %v498 = vrot.slane %v475, 4
        %v499 = vmax.f32 %v475, %v498
        %v500 = vrot.slane %v499, 2
        %v501 = vmax.f32 %v499, %v500
        %v502 = vrot.slane %v501, 1
        %v503 = vmax.f32 %v501, %v502
        %v504 = vrot.slane %v476, 4
        %v505 = vmax.f32 %v476, %v504
        %v506 = vrot.slane %v505, 2
        %v507 = vmax.f32 %v505, %v506
        %v508 = vrot.slane %v507, 1
        %v509 = vmax.f32 %v507, %v508
        %v510 = vrot.slane %v477, 4
        %v511 = vmax.f32 %v477, %v510
        %v512 = vrot.slane %v511, 2
        %v513 = vmax.f32 %v511, %v512
        %v514 = vrot.slane %v513, 1
        %v515 = vmax.f32 %v513, %v514
        %v516 = vrot.slane %v478, 4
        %v517 = vmax.f32 %v478, %v516
        %v518 = vrot.slane %v517, 2
        %v519 = vmax.f32 %v517, %v518
        %v520 = vrot.slane %v519, 1
        %v521 = vmax.f32 %v519, %v520
        %v522 = vrot.slane %v479, 4
        %v523 = vmax.f32 %v479, %v522
        %v524 = vrot.slane %v523, 2
        %v525 = vmax.f32 %v523, %v524
        %v526 = vrot.slane %v525, 1
        %v527 = vmax.f32 %v525, %v526
        %v528 = vld [vmem:[%s2] sm:$0x1]
        %v530 = vlaneseq
        %v531 = vshrl.u32 %v530, 7
        %v532 = vsub.s32 0, %v531
        %v533 = vrot.slane %v528, %v532
        %v535 = vadd.f32 %v485, %v533
        %v536 = vadd.f32 %v491, %v533
        %v537 = vadd.f32 %v497, %v533
        %v538 = vadd.f32 %v503, %v533
        %v539 = vadd.f32 %v509, %v533
        %v540 = vadd.f32 %v515, %v533
        %v541 = vadd.f32 %v521, %v533
        %v542 = vadd.f32 %v527, %v533
        %v543 = vmax.f32 %v535, 0.0
        %v544 = vmax.f32 %v536, 0.0
        %v545 = vmax.f32 %v537, 0.0
        %v546 = vmax.f32 %v538, 0.0
        %v547 = vmax.f32 %v539, 0.0
        %v548 = vmax.f32 %v540, 0.0
        %v549 = vmax.f32 %v541, 0.0
        %v550 = vmax.f32 %v542, 0.0
        %v551 = vpack.c.bf16 %v543, %v543
        %v552 = vpack.c.bf16 %v544, %v544
        %v553 = vpack.c.bf16 %v545, %v545
        %v554 = vpack.c.bf16 %v546, %v546
        %v555 = vpack.c.bf16 %v547, %v547
        %v556 = vpack.c.bf16 %v548, %v548
        %v557 = vpack.c.bf16 %v549, %v549
        %v558 = vpack.c.bf16 %v550, %v550
        %v559 = vld [vmem:[#allocation7] sm:$0xf]
        %v560 = vld [vmem:[#allocation7 + $0x4] sm:$0xf]
        %v561 = vld [vmem:[#allocation7 + $0x8] sm:$0xf]
        %v562 = vld [vmem:[#allocation7 + $0xc] sm:$0xf]
        %v563 = vld [vmem:[#allocation7 + $0x10] sm:$0xf]
        %v564 = vld [vmem:[#allocation7 + $0x14] sm:$0xf]
        %v565 = vld [vmem:[#allocation7 + $0x18] sm:$0xf]
        %v566 = vld [vmem:[#allocation7 + $0x1c] sm:$0xf]
        %v567 = vld [vmem:[#allocation7 + $0x20] sm:$0xf]
        %v568 = vld [vmem:[#allocation7 + $0x24] sm:$0xf]
        %v569 = vld [vmem:[#allocation7 + $0x28] sm:$0xf]
        %v570 = vld [vmem:[#allocation7 + $0x2c] sm:$0xf]
        %v571 = vld [vmem:[#allocation7 + $0x30] sm:$0xf]
        %v572 = vld [vmem:[#allocation7 + $0x34] sm:$0xf]
        %v573 = vld [vmem:[#allocation7 + $0x38] sm:$0xf]
        %v574 = vld [vmem:[#allocation7 + $0x3c] sm:$0xf]
        %v575 = vld [vmem:[%s5] sm:$0x1]
        %v577 = vlaneseq
        %v578 = vshrl.u32 %v577, 7
        %v579 = vsub.s32 0, %v578
        %v580 = vrot.slane %v575, %v579
        %v590 = vunpack.c.l.b16 %v551
        %v591 = vunpack.c.l.b16 %v552
        %v592 = vunpack.c.l.b16 %v553
        %v593 = vunpack.c.l.b16 %v554
        %v594 = vunpack.c.l.b16 %v555
        %v595 = vunpack.c.l.b16 %v556
        %v596 = vunpack.c.l.b16 %v557
        %v597 = vunpack.c.l.b16 %v558
        %v598 = vrot.slane %v591, 7
        %vm599 = vcmask 1041409
        %v600 = vsel %vm599, %v598, %v590
        %v601 = vrot.slane %v592, 6
        %vm602 = vcmask 1042434
        %v603 = vsel %vm602, %v601, %v600
        %v604 = vrot.slane %v593, 5
        %vm605 = vcmask 1043459
        %v606 = vsel %vm605, %v604, %v603
        %v607 = vrot.slane %v594, 4
        %vm608 = vcmask 1044484
        %v609 = vsel %vm608, %v607, %v606
        %v610 = vrot.slane %v595, 3
        %vm611 = vcmask 1045509
        %v612 = vsel %vm611, %v610, %v609
        %v613 = vrot.slane %v596, 2
        %vm614 = vcmask 1046534
        %v615 = vsel %vm614, %v613, %v612
        %v616 = vrot.slane %v597, 1
        %vm617 = vcmask 1047559
        %v618 = vsel %vm617, %v616, %v615
        %v619 = vpack.c.b16 %v618, %v618
        %v637 = vunpack.c.l.b16 %v559
        %v638 = vunpack.c.l.b16 %v560
        %v639 = vunpack.c.l.b16 %v561
        %v640 = vunpack.c.l.b16 %v562
        %v641 = vunpack.c.l.b16 %v563
        %v642 = vunpack.c.l.b16 %v564
        %v643 = vunpack.c.l.b16 %v565
        %v644 = vunpack.c.l.b16 %v566
        %v645 = vunpack.c.l.b16 %v567
        %v646 = vunpack.c.l.b16 %v568
        %v647 = vunpack.c.l.b16 %v569
        %v648 = vunpack.c.l.b16 %v570
        %v649 = vunpack.c.l.b16 %v571
        %v650 = vunpack.c.l.b16 %v572
        %v651 = vunpack.c.l.b16 %v573
        %v652 = vunpack.c.l.b16 %v574
        %v653 = vpack.c.b16 %v638, %v637
        %v654 = vpack.c.b16 %v640, %v639
        %v655 = vpack.c.b16 %v642, %v641
        %v656 = vpack.c.b16 %v644, %v643
        %v657 = vpack.c.b16 %v646, %v645
        %v658 = vpack.c.b16 %v648, %v647
        %v659 = vpack.c.b16 %v650, %v649
        %v660 = vpack.c.b16 %v652, %v651
        %669 = vmatprep.subr.bf16.mxu0 0
        %670 = vmatpush1.bf16.msra.mxu0 %v660
        %671 = vmatprep.subr.bf16.mxu0 0
        %672 = vmatpush1.bf16.msra.mxu0 %v659
        %673 = vmatprep.subr.bf16.mxu0 0
        %674 = vmatpush1.bf16.msra.mxu0 %v658
        %675 = vmatprep.subr.bf16.mxu0 0
        %676 = vmatpush1.bf16.msra.mxu0 %v657
        %677 = vmatprep.subr.bf16.mxu0 0
        %678 = vmatpush1.bf16.msra.mxu0 %v656
        %679 = vmatprep.subr.bf16.mxu0 0
        %680 = vmatpush1.bf16.msra.mxu0 %v655
        %681 = vmatprep.subr.bf16.mxu0 0
        %682 = vmatpush1.bf16.msra.mxu0 %v654
        %683 = vmatprep.subr.bf16.mxu0 0
        %684 = vmatpush1.bf16.msra.mxu0 %v653
        %685 = vmatprep.subr.bf16.mxu0 0
        %686 = vmatpush2.bf16.msra.mxu0 0
        %687 = vmatprep.subr.bf16.mxu0 0
        %688 = vmatpush2.bf16.msra.mxu0 0
        %689 = vmatprep.subr.bf16.mxu0 0
        %690 = vmatpush2.bf16.msra.mxu0 0
        %691 = vmatprep.subr.bf16.mxu0 0
        %692 = vmatpush2.bf16.msra.mxu0 0
        %693 = vmatprep.subr.bf16.mxu0 0
        %694 = vmatpush2.bf16.msra.mxu0 0
        %695 = vmatprep.subr.bf16.mxu0 0
        %696 = vmatpush2.bf16.msra.mxu0 0
        %697 = vmatprep.subr.bf16.mxu0 0
        %698 = vmatpush2.bf16.msra.mxu0 0
        %699 = vmatprep.subr.bf16.mxu0 0
        %700 = vmatpush2.bf16.msra.mxu0 0
        %701 = vmatprep.mubr.bf16.mxu0 0
        %702 = vmatmul.mubr.bf16.gmra.mxu0 %v619
        %v703 = vpop.f32.mrf.mxu0
        %v704 = vadd.f32 %v580, %v703
        %v705 = vpop.f32.mrf.mxu0
        %v706 = vpop.f32.mrf.mxu0
        %v707 = vpop.f32.mrf.mxu0
        %708 = vdwg.mxu0
        %709 = vst [vmem:[%s298] sm:$0xff] %v704
        %s710 = sand.u32 %s163, 1
        %s711 = scalar_lea.sflag [#allocation4], %s710
        %s712 = sand.u32 %s163, 1
        %s713 = smul.addr %s712, 8
        %s714 = scalar_lea.vmem [#allocation8], %s713
        // Predicated region
        $region57: #{tpu_custom_call.1} parent=43 // pred_check
          %p715 = pneg %p173
        $region58: #{tpu_custom_call.1} parent=43 // pred_check_branch
          %717 = sbr.rel (%p715) target = $region60
        $region59: #{tpu_custom_call.1} parent=43 // pred_region
          %s719 = ssub.s32 128, 128
          %720 = vsyncadd %s711, %s719
          %s721 = smul.addr %s24, 128
          %s722 = scalar_lea.hbm %s6, %s721
          %s724 = sshll.u32 %s714, 4
          %s725 = int_to_ptr.vmem [resolvable:$true] %s724
          %727 = dma.vmem_to_hbm [thread:$0]  %s725, 128, %s722, %s711
        $region60: #{tpu_custom_call.1} parent=43 // pred_fallthru
          _
      $region44: #{tpu_custom_call.1} parent=5 // pred_fallthru
        _
      %p728 = scmp.le.s32.totalorder 2, %s19
      // Predicated region
      $region61: #{tpu_custom_call.1} parent=5 // pred_check
        %p729 = pneg %p728
      $region62: #{tpu_custom_call.1} parent=5 // pred_check_branch
        %731 = sbr.rel (%p729) target = $region64
      $region63: #{tpu_custom_call.1} parent=5 // pred_region
        %s732 = ssub.s32 %s19, 2
        // Predicated region
        $region65: #{tpu_custom_call.1} parent=63 // pred_check
          %p733 = pneg %p179
        $region66: #{tpu_custom_call.1} parent=63 // pred_check_branch
          %735 = sbr.rel (%p733) target = $region68
        $region67: #{tpu_custom_call.1} parent=63 // pred_region
          %s736 = sand.u32 %s164, 1
          %s737 = scalar_lea.sflag [#allocation4], %s736
          %s738 = sand.u32 %s164, 1
          %s739 = smul.addr %s738, 8
          %s740 = scalar_lea.vmem [#allocation8], %s739
          %741 = dma.done %s737, 128
        $region68: #{tpu_custom_call.1} parent=63 // pred_fallthru
          _
      $region64: #{tpu_custom_call.1} parent=5 // pred_fallthru
        _
    $region6: #{tpu_custom_call.1} parent=1 // loop_footer
      %s23 = sadd.s32 1, %s19
    $region7: #{tpu_custom_call.1} parent=1 // loop_footer_branch
      %18 = sbr.rel target = $region3
    $region8: #{tpu_custom_call.1} parent=1 // loop_exit
      _
    %742 = vsyncpa [#allocation3], 1
    %s743 = scalar_lea.sflag [#allocation3], 1
    %744 = vsyncpa %s743, 1
    %745 = vsyncpa [#allocation6], 1
    %746 = vsyncpa [#allocation4], 1
    %s747 = scalar_lea.sflag [#allocation4], 1
    %748 = vsyncpa %s747, 1

</llo_original>
